<compile_context>
chip_gen: v7x
topology: tpu7x:2x2x1
jax: 0.10.0
libtpu: 0.0.40
codegen_flags: <defaults>
</compile_context>

<pallas_src>
import jax
import jax.numpy as jnp
from jax.experimental import pallas as pl
from jax.experimental.pallas import tpu as pltpu


def _norm_kernel(img_ref, params_ref, out_ref):
    # img_ref/out_ref : (row_tile, col_tile) VMEM tile
    # params_ref      : (row_tile, 2) per-row [scale, bias], broadcast on lanes
    x = img_ref[...]
    if not jnp.issubdtype(x.dtype, jnp.floating):
        x = x.astype(jnp.float32)
    p = params_ref[...].astype(x.dtype)
    out_ref[...] = (x * p[:, 0:1] + p[:, 1:2]).astype(out_ref.dtype)


def _round_up(x, m):
    return ((x + m - 1) // m) * m


def _tpu_generation():
    try:
        kind = jax.devices()[0].device_kind.lower()
    except Exception:
        return 6
    for g in (7, 6, 5, 4, 3):
        if f"v{g}" in kind:
            return g
    return 6


def _pick_tiles(R, L, itemsize, gen):
    col_target = 4096 if gen >= 6 else 2048   # lanes (multiple of 128)
    row_target = 256                          # sublanes (multiple of 8)

    if L <= col_target:
        col_tile, n_col = L, 1                # full extent: always a legal block dim
    else:
        col_tile = col_target                 # 128-aligned; ragged edge block masked
        n_col = pl.cdiv(L, col_tile)

    if R <= row_target:
        row_tile, n_row = R, 1
    else:
        row_tile = row_target                 # multiple of 8
        n_row = pl.cdiv(R, row_tile)

    # Megacore: guarantee >=2 parallel grid steps when the tensor is big
    # enough that splitting across both TensorCores beats per-step overhead.
    if n_row == 1 and n_col == 1 and R * L * itemsize >= (1 << 20):
        if R >= 16:
            row_tile = _round_up(pl.cdiv(R, 2), 8)
            n_row = pl.cdiv(R, row_tile)
        elif L >= 256:
            col_tile = _round_up(pl.cdiv(L, 2), 128)
            n_col = pl.cdiv(L, col_tile)

    return row_tile, col_tile, n_row, n_col


def normalization(img, mean, std):
    """(img - mean.view(-1,1,1)) / std.view(-1,1,1), img in NCHW."""
    N, C, H, W = img.shape
    mean = jnp.asarray(mean, dtype=jnp.float32)
    std = jnp.asarray(std, dtype=jnp.float32)
    assert mean.shape == (C,) and std.shape == (C,)

    # Affine refactor:  y = x * scale + bias  ==  (x - mean) / std
    scale_c = 1.0 / std
    bias_c = -mean / std

    R = N * C              # one row per (n, c) plane
    L = H * W              # lane-dense flattened spatial extent

    # Per-row params merged into one (R, 2) array -> a single tiny DMA per row
    # tile, reused across the innermost column grid axis.
    params = jnp.stack([jnp.tile(scale_c, N), jnp.tile(bias_c, N)], axis=-1)

    out_dtype = img.dtype if jnp.issubdtype(img.dtype, jnp.floating) else jnp.float32

    img2 = img.reshape(R, L)

    row_tile, col_tile, n_row, n_col = _pick_tiles(
        R, L, jnp.dtype(img.dtype).itemsize, _tpu_generation())

    out2 = pl.pallas_call(
        _norm_kernel,
        out_shape=jax.ShapeDtypeStruct((R, L), out_dtype),
        grid=(n_row, n_col),
        in_specs=[
            pl.BlockSpec((row_tile, col_tile), lambda i, j: (i, j)),
            pl.BlockSpec((row_tile, 2), lambda i, j: (i, 0)),
        ],
        out_specs=pl.BlockSpec((row_tile, col_tile), lambda i, j: (i, j)),
        compiler_params=pltpu.CompilerParams(
            dimension_semantics=("parallel", "parallel"),
        ),
    )(img2, params)

    return out2.reshape(N, C, H, W)


if __name__ == "__main__":
    # ImageNet normalization constants (the canonical parameters of this module).
    mean = jnp.array([0.485, 0.456, 0.406], dtype=jnp.float32)
    std = jnp.array([0.229, 0.224, 0.225], dtype=jnp.float32)

    key = jax.random.PRNGKey(0)

    # Main check: NCHW f32, small 128-aligned spatial extent.
    img = jax.random.uniform(key, (2, 3, 16, 16), dtype=jnp.float32)
    out = jax.block_until_ready(normalization(img, mean, std))
    ref = (img - mean.reshape(-1, 1, 1)) / std.reshape(-1, 1, 1)
    assert out.shape == img.shape and out.dtype == img.dtype
    assert jnp.allclose(out, ref, atol=1e-6, rtol=1e-5)

    # Second check: odd, non-128-aligned spatial extent (full-extent block path).
    img2 = jax.random.uniform(jax.random.PRNGKey(1), (2, 3, 11, 13), dtype=jnp.float32)
    out2 = jax.block_until_ready(normalization(img2, mean, std))
    ref2 = (img2 - mean.reshape(-1, 1, 1)) / std.reshape(-1, 1, 1)
    assert out2.shape == img2.shape and out2.dtype == img2.dtype
    assert jnp.allclose(out2, ref2, atol=1e-6, rtol=1e-5)

    print("KERNEL_OK")
</pallas_src>

<mosaic_0001>
module attributes {stable_mosaic.version = 11 : i64} {
  func.func @_norm_kernel(%arg0: i32, %arg1: i32, %arg2: memref<6x256xf32, #tpu.memory_space<vmem>>, %arg3: memref<6x2xf32, #tpu.memory_space<vmem>>, %arg4: memref<6x256xf32, #tpu.memory_space<vmem>>) attributes {dimension_semantics = [#tpu.dimension_semantics<parallel>, #tpu.dimension_semantics<parallel>], iteration_bounds = array<i64: 1, 1>, scalar_prefetch = 0 : i64, scratch_operands = 0 : i64, tpu.core_type = #tpu.core_type<tc>, window_params = [{transform_indices = @transform_0, window_bounds = array<i64: 6, 256>}, {transform_indices = @transform_1, window_bounds = array<i64: 6, 2>}, {transform_indices = @transform_2, window_bounds = array<i64: 6, 256>}]} {
    %c0 = arith.constant 0 : index
    %c0_0 = arith.constant 0 : index
    %0 = vector.load %arg2[%c0, %c0_0] : memref<6x256xf32, #tpu.memory_space<vmem>>, vector<6x256xf32>
    %c0_1 = arith.constant 0 : index
    %c0_2 = arith.constant 0 : index
    %1 = vector.load %arg3[%c0_1, %c0_2] : memref<6x2xf32, #tpu.memory_space<vmem>>, vector<6x2xf32>
    %2 = vector.extract_strided_slice %1 {offsets = [0, 0], sizes = [6, 1], strides = [1, 1]} : vector<6x2xf32> to vector<6x1xf32>
    %3 = vector.broadcast %2 : vector<6x1xf32> to vector<6x256xf32>
    %4 = arith.mulf %0, %3 : vector<6x256xf32>
    %5 = vector.extract_strided_slice %1 {offsets = [0, 1], sizes = [6, 1], strides = [1, 1]} : vector<6x2xf32> to vector<6x1xf32>
    %6 = vector.broadcast %5 : vector<6x1xf32> to vector<6x256xf32>
    %7 = arith.addf %4, %6 : vector<6x256xf32>
    %c0_3 = arith.constant 0 : index
    %c0_4 = arith.constant 0 : index
    %8 = vector.load %arg4[%c0_3, %c0_4] : memref<6x256xf32, #tpu.memory_space<vmem>>, vector<6x256xf32>
    tpu.vector_store %arg4[%c0_3, %c0_4], %7 {strides = array<i32>} : memref<6x256xf32, #tpu.memory_space<vmem>>, vector<6x256xf32>,
    return
  }
  func.func @transform_0(%arg0: i32, %arg1: i32) -> (i32, i32) {
    %c0_i32 = arith.constant 0 : i32
    return %arg0, %arg1 : i32, i32
  }
  func.func @transform_1(%arg0: i32, %arg1: i32) -> (i32, i32) {
    %c0_i32 = arith.constant 0 : i32
    %c0_i32_0 = arith.constant 0 : i32
    return %arg0, %c0_i32 : i32, i32
  }
  func.func @transform_2(%arg0: i32, %arg1: i32) -> (i32, i32) {
    %c0_i32 = arith.constant 0 : i32
    return %arg0, %arg1 : i32, i32
  }
}

</mosaic_0001>

<llo_original>
// kernel: tpu_custom_call.1
$region0: #{tpu_custom_call.1}
  #allocation0 [shape = 'u32[]', space=smem, size = 0x4, offset = 0x4, fixed_abs, tag = 'smem constant byte address 0x4 - core index']
  #allocation1 [shape = 'u32[144,128]{1,0:T(1,128)}', space=vmem, size = 0x12000, scoped, tag = 'internal scratch']
  %s0 = inlined_call_operand.hbm [shape: f32[6,256], index: 0, kind: input, shape index: {}]
  %s1 = inlined_call_operand.vmem [shape: f32[6,2], index: 1, kind: input, shape index: {}]
  %s2 = inlined_call_operand.hbm [shape: f32[6,256], index: 2, kind: output, shape index: {}]
  %s3 = sld [smem:[#allocation0]]
  $region22: #{tpu_custom_call.1} parent=0
    _
  %s5 = ssub.s32 1, %s3
  %s6 = scalar_select 0, %s5, %s3
  $region1: #{tpu_custom_call.1} parent=0
    #allocation2 [shape = 'u8[8192]{0}', space=vmem, size = 0x2000, scoped, tag = 'input window, operand 0, single buffered']
    #allocation3 [shape = 's32[1]{0}', space=sflag, size = 0x4, scoped, tag = 'scoped memory for tpu_custom_call.1']
    #allocation4 [shape = 's32[1]{0}', space=sflag, size = 0x4, scoped, tag = 'scoped memory for tpu_custom_call.1']
    #allocation5 [shape = 'u8[8192]{0}', space=vmem, size = 0x2000, scoped, tag = 'output window, operand 0, single buffered']
    %7 = vsyncpa [#allocation3], 0
    %8 = vsyncpa [#allocation4], 0
    // Predicated region
    $region2: #{tpu_custom_call.1} parent=1 // pred_check
      _
    $region3: #{tpu_custom_call.1} parent=1 // pred_check_branch
      %10 = sbr.rel (0) target = $region5
    $region4: #{tpu_custom_call.1} parent=1 // pred_region
      %s12 = ssub.s32 256, 256
      %13 = vsyncadd [#allocation3], %s12
      %s15 = sshll.u32 [#allocation2], 4
      %s16 = int_to_ptr.vmem [resolvable:$true] %s15
      %18 = dma.hbm_to_vmem [thread:$0]  %s0, 256, %s16, [#allocation3]
    $region5: #{tpu_custom_call.1} parent=1 // pred_fallthru
      _
    // Predicated region
    $region6: #{tpu_custom_call.1} parent=1 // pred_check
      _
    $region7: #{tpu_custom_call.1} parent=1 // pred_check_branch
      %20 = sbr.rel (0) target = $region9
    $region8: #{tpu_custom_call.1} parent=1 // pred_region
      _
    $region9: #{tpu_custom_call.1} parent=1 // pred_fallthru
      _
    // Predicated region
    $region10: #{tpu_custom_call.1} parent=1 // pred_check
      _
    $region11: #{tpu_custom_call.1} parent=1 // pred_check_branch
      %22 = sbr.rel (0) target = $region13
    $region12: #{tpu_custom_call.1} parent=1 // pred_region
      %23 = dma.done [#allocation3], 256
    $region13: #{tpu_custom_call.1} parent=1 // pred_fallthru
      _
    %v24 = vld [vmem:[#allocation2] sm:$0x3f]
    %v25 = vld [vmem:[#allocation2 + $0x8] sm:$0x3f]
    %v26 = vld [vmem:[%s1] sm:$0x3f]
    %28 = vset.pattern.permute.xlu0 0
    %29 = vperm.xlu0 %28, %v26
    %v30 = vpop.permute.xlu0 %29
    %v32 = vmul.f32 %v24, %v30
    %v33 = vmul.f32 %v25, %v30
    %34 = vset.pattern.permute.xlu0 1
    %35 = vperm.xlu0 %34, %v26
    %v36 = vpop.permute.xlu0 %35
    %v38 = vadd.f32 %v32, %v36
    %v39 = vadd.f32 %v33, %v36
    %40 = vst [vmem:[#allocation5] sm:$0x3f] %v38
    %41 = vst [vmem:[#allocation5 + $0x8] sm:$0x3f] %v39
    // Predicated region
    $region14: #{tpu_custom_call.1} parent=1 // pred_check
      _
    $region15: #{tpu_custom_call.1} parent=1 // pred_check_branch
      %43 = sbr.rel (0) target = $region17
    $region16: #{tpu_custom_call.1} parent=1 // pred_region
      %s45 = ssub.s32 256, 256
      %46 = vsyncadd [#allocation4], %s45
      %s48 = sshll.u32 [#allocation5], 4
      %s49 = int_to_ptr.vmem [resolvable:$true] %s48
      %51 = dma.vmem_to_hbm [thread:$0]  %s49, 256, %s2, [#allocation4]
    $region17: #{tpu_custom_call.1} parent=1 // pred_fallthru
      _
    // Predicated region
    $region18: #{tpu_custom_call.1} parent=1 // pred_check
      _
    $region19: #{tpu_custom_call.1} parent=1 // pred_check_branch
      %53 = sbr.rel (0) target = $region21
    $region20: #{tpu_custom_call.1} parent=1 // pred_region
      %54 = dma.done [#allocation4], 256
    $region21: #{tpu_custom_call.1} parent=1 // pred_fallthru
      _
    %55 = vsyncpa [#allocation3], 1
    %56 = vsyncpa [#allocation4], 1

</llo_original>
